<compile_context>
chip_gen: v7x
topology: tpu7x:2x2x1
jax: 0.10.0
libtpu: 0.0.40
codegen_flags: <defaults>
</compile_context>

<pallas_src>
import functools
import math

import jax
import jax.numpy as jnp
from jax.experimental import pallas as pl
from jax.experimental.pallas import tpu as pltpu


# Working-set budget for one grid step (x + out + pe blocks, incl. double
# buffering).  Stays inside every generation's scoped-VMEM ceiling; the scoped
# limit is also raised explicitly below so v5e's 16 MiB default is never the
# binding constraint.
_VMEM_BUDGET_BYTES = 16 * 1024 * 1024
_VMEM_LIMIT_BYTES = 32 * 1024 * 1024


def _build_pe_table(d_model: int, max_len: int, dtype=jnp.float32) -> jnp.ndarray:
    """Sinusoidal table, shape (max_len, d_model), built once in the activation
    dtype (registered-buffer style, like the PyTorch module's `pe` buffer)."""
    assert d_model % 2 == 0, "d_model must be even (matches the PyTorch module)"
    position = jnp.arange(0, max_len, dtype=jnp.float32)[:, None]          # (max_len, 1)
    div_term = jnp.exp(
        jnp.arange(0, d_model, 2, dtype=jnp.float32) * (-math.log(10000.0) / d_model)
    )                                                                       # (d_model/2,)
    angles = position * div_term                                            # (max_len, d/2)
    pe = jnp.zeros((max_len, d_model), dtype=jnp.float32)
    pe = pe.at[:, 0::2].set(jnp.sin(angles))
    pe = pe.at[:, 1::2].set(jnp.cos(angles))
    return pe.astype(dtype)


def _round_up(n: int, m: int) -> int:
    return ((n + m - 1) // m) * m


def _row_align(dtype) -> int:
    """Packed-sublane row multiple: 8 for 4-byte, 16 for 2-byte, 32 for 1-byte."""
    return 8 * max(1, 4 // jnp.dtype(dtype).itemsize)


def _fit_rows(limit: int, bytes_per_row: int, align: int,
              budget: int = _VMEM_BUDGET_BYTES) -> int:
    """Largest multiple of `align` whose total bytes fit `budget`, clamped to
    [align, round_up(limit, align)].  Always a multiple of `align` so the
    second-minor block dim satisfies the (8,128) tiling rule."""
    n = budget // max(bytes_per_row, 1)
    n = max(align, (n // align) * align)
    return min(n, _round_up(max(limit, 1), align))


def _seq_tile(seq_len: int, bytes_per_row: int, align: int,
              tile_rows: int | None) -> int:
    if tile_rows is not None:
        return tile_rows
    tS = _fit_rows(seq_len, bytes_per_row, align)
    # Keep at least 2 grid steps so v7x can shard the "parallel" S axis across
    # its 2 TensorCores (extra ~0.35us step overhead is noise on v5e/v6e).
    if seq_len > align:
        tS = min(tS, _round_up(pl.cdiv(seq_len, 2), align))
    return tS


# ----------------------------- kernels --------------------------------------


def _pe_add_kernel(x_ref, pe_ref, o_ref):
    # Same-shape add (2-D path) or sublane-broadcast add
    # ((tS, tB, D) + (tS, 1, D)) in the batched-blocks path.
    o_ref[...] = x_ref[...] + pe_ref[...]


def _lane_repeat(v, reps: int):
    """result[:, k] = v[:, k % D]; repeat along the lane axis via doubling
    concatenation (pure XLU work, no reshape/relayout)."""
    if reps == 1:
        return v
    d = v.shape[-1]
    out = v
    while out.shape[-1] < reps * d:
        out = jnp.concatenate([out, out], axis=-1)
    return out if out.shape[-1] == reps * d else out[:, : reps * d]


def _pe_add_flat_kernel(x_ref, pe_ref, o_ref, *, batch: int):
    # x/o: (tS, B*D) lane-collapsed; pe: (tS, D).  Broadcasting pe over the
    # batch happens in-kernel so the pe HBM read is S*D, not S*B*D.
    o_ref[...] = x_ref[...] + _lane_repeat(pe_ref[...], batch)


# ----------------------------- forward ---------------------------------------


def positional_encoding_forward(x: jnp.ndarray, pe_table: jnp.ndarray, *,
                                tile_rows: int | None = None,
                                batched_blocks: bool | None = None) -> jnp.ndarray:
    """out = x + pe_table[:S]  (dropout = identity, eval mode).

    x: (S, B, D) or (S, D); pe_table: (max_len, D) built in x.dtype at init.
    NOTE: x is donated via input_output_aliases={0: 0}; do not read x after
    calling this function.
    """
    max_len, d_model = pe_table.shape
    if pe_table.dtype != x.dtype:
        # Should not happen if the table was built in the activation dtype at
        # init; kept only as a safety net (costs an extra HBM pass over pe).
        pe_table = pe_table.astype(x.dtype)
    it = jnp.dtype(x.dtype).itemsize
    align = _row_align(x.dtype)
    cp_1d = pltpu.CompilerParams(dimension_semantics=("parallel",),
                                 vmem_limit_bytes=_VMEM_LIMIT_BYTES)

    # ------------------------- 2-D branch: (S, D) ----------------------------
    if x.ndim == 2:
        S, D = x.shape
        assert D == d_model and S <= max_len
        # NOTE: if D < 128 the stores are masked; acceptable for this rare,
        # tiny branch (flattening would need a per-call pe[:S] materialization).
        tS = _seq_tile(S, 2 * 3 * D * it, align, tile_rows)
        return pl.pallas_call(
            _pe_add_kernel,
            out_shape=jax.ShapeDtypeStruct((S, D), x.dtype),
            grid=(pl.cdiv(S, tS),),
            in_specs=[
                pl.BlockSpec((tS, D), lambda i: (i, 0)),
                pl.BlockSpec((tS, D), lambda i: (i, 0)),   # rows of the full pe table
            ],
            out_specs=pl.BlockSpec((tS, D), lambda i: (i, 0)),
            input_output_aliases={0: 0},
            compiler_params=cp_1d,
        )(x, pe_table)

    # ------------------------- 3-D branch: (S, B, D) -------------------------
    assert x.ndim == 3, "expected (S, B, D) or (S, D)"
    S, B, D = x.shape
    assert D == d_model and S <= max_len
    F = B * D

    # Per-seq-row working set of the lane-collapsed path: x block + out block
    # + in-kernel broadcast temporary (each F) + pe block (D), double-buffered.
    flat_row_bytes = 2 * (3 * F + D) * it
    if batched_blocks is None:
        # Fall back to 3-D blocks only when even the minimum-row collapsed tile
        # would exceed the VMEM budget (very large B*D) and batch is splittable.
        batched_blocks = (B >= align) and (align * flat_row_bytes > _VMEM_BUDGET_BYTES)

    if not batched_blocks:
        # Lane-collapsed path: last dim B*D (lane-dense, unmasked stores, no
        # sublane padding for B < 8); pe DMA stays S*D via in-kernel broadcast.
        tS = _seq_tile(S, flat_row_bytes, align, tile_rows)
        out = pl.pallas_call(
            functools.partial(_pe_add_flat_kernel, batch=B),
            out_shape=jax.ShapeDtypeStruct((S, F), x.dtype),
            grid=(pl.cdiv(S, tS),),
            in_specs=[
                pl.BlockSpec((tS, F), lambda i: (i, 0)),
                pl.BlockSpec((tS, D), lambda i: (i, 0)),
            ],
            out_specs=pl.BlockSpec((tS, F), lambda i: (i, 0)),
            input_output_aliases={0: 0},
            compiler_params=cp_1d,
        )(x.reshape(S, F), pe_table)
        return out.reshape(S, B, D)

    # Batched-blocks fallback (huge B*D): second grid axis over batch keeps the
    # block bytes bounded (guards v5e's small scoped-VMEM default).  B >= 8
    # here, so the (tB, D) minor dims are sublane-dense.
    tB = _fit_rows(B, 2 * 2 * align * D * it, align)
    tS = _seq_tile(S, 2 * (2 * tB * D + D) * it, align, tile_rows)
    return pl.pallas_call(
        _pe_add_kernel,
        out_shape=jax.ShapeDtypeStruct((S, B, D), x.dtype),
        grid=(pl.cdiv(S, tS), pl.cdiv(B, tB)),
        in_specs=[
            pl.BlockSpec((tS, tB, D), lambda i, j: (i, j, 0)),
            pl.BlockSpec((tS, 1, D), lambda i, j: (i, 0, 0)),  # broadcast over batch
        ],
        out_specs=pl.BlockSpec((tS, tB, D), lambda i, j: (i, j, 0)),
        input_output_aliases={0: 0},
        compiler_params=pltpu.CompilerParams(
            dimension_semantics=("parallel", "parallel"),
            vmem_limit_bytes=_VMEM_LIMIT_BYTES),
    )(x, pe_table[:, None, :])


if __name__ == "__main__":
    d_model = 32
    max_len = 64
    seq_len = 16
    batch = 2

    pe_table = _build_pe_table(d_model, max_len, dtype=jnp.float32)

    key = jax.random.PRNGKey(0)
    k3, k2, kb, kg = jax.random.split(key, 4)

    # --- 3-D branch, D < 128 (lane-collapsed path, 2 grid steps) -------------
    x3 = jax.random.normal(k3, (seq_len, batch, d_model), dtype=jnp.float32)
    # Compute references BEFORE the kernel call: x is donated via
    # input_output_aliases and must not be read afterwards.
    ref3 = x3 + pe_table[:seq_len][:, None, :]
    out3 = positional_encoding_forward(x3, pe_table)
    jax.block_until_ready(out3)
    assert out3.shape == (seq_len, batch, d_model)
    assert jnp.allclose(out3, ref3, atol=1e-6), "3D (D<128) mismatch"

    # --- 2-D branch of the forward -------------------------------------------
    x2 = jax.random.normal(k2, (seq_len, d_model), dtype=jnp.float32)
    ref2 = x2 + pe_table[:seq_len]
    out2 = positional_encoding_forward(x2, pe_table)
    jax.block_until_ready(out2)
    assert jnp.allclose(out2, ref2, atol=1e-6), "2D mismatch"

    # --- 3-D branch, D a multiple of 128 (still lane-collapsed) --------------
    d_big = 128
    pe_big = _build_pe_table(d_big, max_len, dtype=jnp.float32)
    xb = jax.random.normal(kb, (seq_len, batch, d_big), dtype=jnp.float32)
    refb = xb + pe_big[:seq_len][:, None, :]
    outb = positional_encoding_forward(xb, pe_big)
    jax.block_until_ready(outb)
    assert jnp.allclose(outb, refb, atol=1e-6), "3D (D%128==0) mismatch"

    # --- 3-D batched-blocks fallback path (forced, B >= 8) --------------------
    xg = jax.random.normal(kg, (seq_len, 8, d_big), dtype=jnp.float32)
    refg = xg + pe_big[:seq_len][:, None, :]
    outg = positional_encoding_forward(xg, pe_big, batched_blocks=True)
    jax.block_until_ready(outg)
    assert jnp.allclose(outg, refg, atol=1e-6), "3D batched-blocks mismatch"

    print("KERNEL_OK")
</pallas_src>

<mosaic_0001>
module attributes {stable_mosaic.version = 11 : i64} {
  func.func @_pe_add_flat_kernel(%arg0: i32, %arg1: memref<8x64xf32, #tpu.memory_space<vmem>>, %arg2: memref<8x32xf32, #tpu.memory_space<vmem>>, %arg3: memref<8x64xf32, #tpu.memory_space<vmem>>) attributes {dimension_semantics = [#tpu.dimension_semantics<parallel>], iteration_bounds = array<i64: 2>, scalar_prefetch = 0 : i64, scratch_operands = 0 : i64, tpu.core_type = #tpu.core_type<tc>, window_params = [{transform_indices = @transform_0, window_bounds = array<i64: 8, 64>}, {transform_indices = @transform_1, window_bounds = array<i64: 8, 32>}, {transform_indices = @transform_2, window_bounds = array<i64: 8, 64>}]} {
    %c0 = arith.constant 0 : index
    %c0_0 = arith.constant 0 : index
    %0 = vector.load %arg1[%c0, %c0_0] : memref<8x64xf32, #tpu.memory_space<vmem>>, vector<8x64xf32>
    %c0_1 = arith.constant 0 : index
    %c0_2 = arith.constant 0 : index
    %1 = vector.load %arg2[%c0_1, %c0_2] : memref<8x32xf32, #tpu.memory_space<vmem>>, vector<8x32xf32>
    %2 = tpu.concatenate %1, %1 in 1 : vector<8x32xf32>, vector<8x32xf32> -> vector<8x64xf32>
    %3 = arith.addf %0, %2 : vector<8x64xf32>
    %c0_3 = arith.constant 0 : index
    %c0_4 = arith.constant 0 : index
    %4 = vector.load %arg3[%c0_3, %c0_4] : memref<8x64xf32, #tpu.memory_space<vmem>>, vector<8x64xf32>
    tpu.vector_store %arg3[%c0_3, %c0_4], %3 {strides = array<i32>} : memref<8x64xf32, #tpu.memory_space<vmem>>, vector<8x64xf32>,
    return
  }
  func.func @transform_0(%arg0: i32) -> (i32, i32) {
    %c0_i32 = arith.constant 0 : i32
    %c0_i32_0 = arith.constant 0 : i32
    return %arg0, %c0_i32 : i32, i32
  }
  func.func @transform_1(%arg0: i32) -> (i32, i32) {
    %c0_i32 = arith.constant 0 : i32
    %c0_i32_0 = arith.constant 0 : i32
    return %arg0, %c0_i32 : i32, i32
  }
  func.func @transform_2(%arg0: i32) -> (i32, i32) {
    %c0_i32 = arith.constant 0 : i32
    %c0_i32_0 = arith.constant 0 : i32
    return %arg0, %c0_i32 : i32, i32
  }
}

</mosaic_0001>

<llo_original>
// kernel: tpu_custom_call.1
$region0: #{tpu_custom_call.1}
  #allocation0 [shape = 'u32[]', space=smem, size = 0x4, offset = 0x4, fixed_abs, tag = 'smem constant byte address 0x4 - core index']
  #allocation1 [shape = 'u32[144,128]{1,0:T(1,128)}', space=vmem, size = 0x12000, scoped, tag = 'internal scratch']
  %s0 = inlined_call_operand.hbm [shape: f32[16,64], index: 0, kind: input, shape index: {}, may-alias: {0,2}]
  %s1 = inlined_call_operand.vmem [shape: f32[64,32], index: 1, kind: input, shape index: {}]
  %s2 = inlined_call_operand.hbm [shape: f32[16,64], index: 2, kind: output, shape index: {}, may-alias: {0,2}]
  %s3 = sld [smem:[#allocation0]]
  $region45: #{tpu_custom_call.1} parent=0
    _
  %s5 = ssub.s32 1, %s3
  %s6 = scalar_select 0, %s5, %s3
  $region1: #{tpu_custom_call.1} parent=0
    #allocation2 [shape = 'u8[8192]{0}', space=vmem, size = 0x2000, scoped, tag = 'input window, operand 0']
    #allocation3 [shape = 's32[2]{0}', space=sflag, size = 0x8, scoped, tag = 'scoped memory for tpu_custom_call.1']
    #allocation4 [shape = 's32[2]{0}', space=sflag, size = 0x8, scoped, tag = 'scoped memory for tpu_custom_call.1']
    #allocation5 [shape = 'u8[8192]{0}', space=vmem, size = 0x2000, scoped, tag = 'output window, operand 0']
    %7 = vsyncpa [#allocation3], 0
    %s8 = scalar_lea.sflag [#allocation3], 1
    %9 = vsyncpa %s8, 0
    %10 = vsyncpa [#allocation4], 0
    %s11 = scalar_lea.sflag [#allocation4], 1
    %12 = vsyncpa %s11, 0
    loop: start=0, step=1, limit=4
    $region2: #{tpu_custom_call.1} parent=1 // loop_pre_header
      _
    $region3: #{tpu_custom_call.1} parent=1 // loop_header
      %s14 = sphi 0, %s18
      %p15 = scmp.ge.s32.totalorder %s14, 4
      %s24 = sphi 0, %s26
      %s27 = sphi 0, %s24
      %s28 = sphi 0, %s27
      %s44 = sphi 0, %s28
      %s50 = sphi 0, %s52
      %s53 = sphi 0, %s50
      %s54 = sphi 0, %s53
      %s70 = sphi 0, %s54
      %s76 = sphi 0, %s78
      %s79 = sphi 0, %s76
      %s80 = sphi 0, %s79
      %s96 = sphi 0, %s80
    $region4: #{tpu_custom_call.1} parent=1 // loop_header_branch
      %17 = sbr.rel (%p15) target = $region8
    $region5: #{tpu_custom_call.1} parent=1 // loop_body
      %s19 = ssub.s32 %s14, 1
      %s20 = ssub.s32 %s14, 2
      %s21 = sadd.s32 %s14, 1
      %s22 = ssub.s32 %s14, %s21
      %p23 = scmp.eq.s32.totalorder %s22, 0
      %s25 = sadd.s32 %s24, 1
      %s26 = scalar_select %p23, %s24, %s25
      %p29 = pneg %p23
      %p30 = scmp.eq.s32.totalorder %s14, 1
      %p31 = por %p29, %p30
      %p32 = scmp.ne.s32.totalorder %s24, %s27
      %p33 = scmp.eq.s32.totalorder %s14, 0
      %p34 = por %p32, %p33
      %p35 = scmp.ne.s32.totalorder %s24, %s27
      %p36 = scmp.eq.s32.totalorder %s19, 1
      %p37 = por %p35, %p36
      %p38 = scmp.ne.s32.totalorder %s27, %s28
      %p39 = scmp.eq.s32.totalorder %s19, 0
      %p40 = por %p38, %p39
      %p41 = scmp.ne.s32.totalorder %s27, %s28
      %p42 = scmp.eq.s32.totalorder %s20, 1
      %p43 = por %p41, %p42
      %p45 = scmp.ne.s32.totalorder %s28, %s44
      %p46 = scmp.eq.s32.totalorder %s20, 0
      %p47 = por %p45, %p46
      %s48 = ssub.s32 %s14, %s21
      %p49 = scmp.eq.s32.totalorder %s48, 0
      %s51 = sadd.s32 %s50, 1
      %s52 = scalar_select %p49, %s50, %s51
      %p55 = pneg %p49
      %p56 = scmp.eq.s32.totalorder %s14, 1
      %p57 = por %p55, %p56
      %p58 = scmp.ne.s32.totalorder %s50, %s53
      %p59 = scmp.eq.s32.totalorder %s14, 0
      %p60 = por %p58, %p59
      %p61 = scmp.ne.s32.totalorder %s50, %s53
      %p62 = scmp.eq.s32.totalorder %s19, 1
      %p63 = por %p61, %p62
      %p64 = scmp.ne.s32.totalorder %s53, %s54
      %p65 = scmp.eq.s32.totalorder %s19, 0
      %p66 = por %p64, %p65
      %p67 = scmp.ne.s32.totalorder %s53, %s54
      %p68 = scmp.eq.s32.totalorder %s20, 1
      %p69 = por %p67, %p68
      %p71 = scmp.ne.s32.totalorder %s54, %s70
      %p72 = scmp.eq.s32.totalorder %s20, 0
      %p73 = por %p71, %p72
      %s74 = ssub.s32 %s14, %s21
      %p75 = scmp.eq.s32.totalorder %s74, 0
      %s77 = sadd.s32 %s76, 1
      %s78 = scalar_select %p75, %s76, %s77
      %p81 = pneg %p75
      %p82 = scmp.eq.s32.totalorder %s14, 1
      %p83 = por %p81, %p82
      %p84 = scmp.ne.s32.totalorder %s76, %s79
      %p85 = scmp.eq.s32.totalorder %s14, 0
      %p86 = por %p84, %p85
      %p87 = scmp.ne.s32.totalorder %s76, %s79
      %p88 = scmp.eq.s32.totalorder %s19, 1
      %p89 = por %p87, %p88
      %p90 = scmp.ne.s32.totalorder %s79, %s80
      %p91 = scmp.eq.s32.totalorder %s19, 0
      %p92 = por %p90, %p91
      %p93 = scmp.ne.s32.totalorder %s79, %s80
      %p94 = scmp.eq.s32.totalorder %s20, 1
      %p95 = por %p93, %p94
      %p97 = scmp.ne.s32.totalorder %s80, %s96
      %p98 = scmp.eq.s32.totalorder %s20, 0
      %p99 = por %p97, %p98
      %p100 = scmp.le.s32.totalorder 1, %s14
      %p101 = scmp.lt.s32.totalorder %s14, 3
      %p102 = pnand %p100, %p101
      %p103 = pneg %p102
      // Predicated region
      $region9: #{tpu_custom_call.1} parent=5 // pred_check
        _
      $region10: #{tpu_custom_call.1} parent=5 // pred_check_branch
        %105 = sbr.rel (%p102) target = $region12
      $region11: #{tpu_custom_call.1} parent=5 // pred_region
        %s106 = ssub.s32 %s14, 1
      $region12: #{tpu_custom_call.1} parent=5 // pred_fallthru
        _
      %p107 = scmp.lt.s32.totalorder %s14, 2
      // Predicated region
      $region13: #{tpu_custom_call.1} parent=5 // pred_check
        %p108 = pneg %p107
      $region14: #{tpu_custom_call.1} parent=5 // pred_check_branch
        %110 = sbr.rel (%p108) target = $region16
      $region15: #{tpu_custom_call.1} parent=5 // pred_region
        // Predicated region
        $region17: #{tpu_custom_call.1} parent=15 // pred_check
          %p111 = pneg %p34
        $region18: #{tpu_custom_call.1} parent=15 // pred_check_branch
          %113 = sbr.rel (%p111) target = $region20
        $region19: #{tpu_custom_call.1} parent=15 // pred_region
          %s114 = sand.u32 %s24, 1
          %s115 = scalar_lea.sflag [#allocation3], %s114
          %s116 = sand.u32 %s24, 1
          %s117 = smul.addr %s116, 8
          %s118 = scalar_lea.vmem [#allocation2], %s117
          %s120 = ssub.s32 128, 128
          %121 = vsyncadd %s115, %s120
          %s122 = smul.addr %s14, 128
          %s123 = scalar_lea.hbm %s0, %s122
          %s125 = sshll.u32 %s118, 4
          %s126 = int_to_ptr.vmem [resolvable:$true] %s125
          %128 = dma.hbm_to_vmem [thread:$0]  %s123, 128, %s126, %s115
        $region20: #{tpu_custom_call.1} parent=15 // pred_fallthru
          _
        // Predicated region
        $region21: #{tpu_custom_call.1} parent=15 // pred_check
          %p129 = pneg %p60
        $region22: #{tpu_custom_call.1} parent=15 // pred_check_branch
          %131 = sbr.rel (%p129) target = $region24
        $region23: #{tpu_custom_call.1} parent=15 // pred_region
          %p132 = scmp.lt.s32.totalorder %s14, 7
          %s133 = scalar_select %p132, %s14, 7
          %s134 = smul.addr %s133, 8
          %s135 = scalar_lea.vmem %s1, %s134
        $region24: #{tpu_custom_call.1} parent=15 // pred_fallthru
          _
      $region16: #{tpu_custom_call.1} parent=5 // pred_fallthru
        _
      %p136 = scmp.le.s32.totalorder 1, %s14
      %p137 = scmp.lt.s32.totalorder %s14, 3
      %p138 = pnand %p136, %p137
      %p139 = pneg %p138
      // Predicated region
      $region25: #{tpu_custom_call.1} parent=5 // pred_check
        _
      $region26: #{tpu_custom_call.1} parent=5 // pred_check_branch
        %141 = sbr.rel (%p138) target = $region28
      $region27: #{tpu_custom_call.1} parent=5 // pred_region
        %s142 = ssub.s32 %s14, 1
        %s143 = sand.u32 %s27, 1
        %s144 = scalar_lea.sflag [#allocation3], %s143
        %s145 = sand.u32 %s27, 1
        %s146 = smul.addr %s145, 8
        %s147 = scalar_lea.vmem [#allocation2], %s146
        // Predicated region
        $region29: #{tpu_custom_call.1} parent=27 // pred_check
          %p148 = pneg %p40
        $region30: #{tpu_custom_call.1} parent=27 // pred_check_branch
          %150 = sbr.rel (%p148) target = $region32
        $region31: #{tpu_custom_call.1} parent=27 // pred_region
          %151 = dma.done %s144, 128
        $region32: #{tpu_custom_call.1} parent=27 // pred_fallthru
          _
        %s152 = sand.u32 %s27, 1
        %s153 = scalar_lea.sflag [#allocation3], %s152
        %s154 = sand.u32 %s27, 1
        %s155 = smul.addr %s154, 8
        %s156 = scalar_lea.vmem [#allocation2], %s155
        %p157 = pneg %p40
        %p158 = pneg %p37
        %p159 = scmp.lt.s32.totalorder %s19, 7
        %s160 = scalar_select %p159, %s19, 7
        %s161 = smul.addr %s160, 8
        %s162 = scalar_lea.vmem %s1, %s161
        %p163 = pneg %p66
        %p164 = pneg %p63
        %p165 = pneg %p92
        %p166 = pneg %p89
        %s167 = sand.u32 %s79, 1
        %s168 = scalar_lea.sflag [#allocation4], %s167
        %s169 = sand.u32 %s79, 1
        %s170 = smul.addr %s169, 8
        %s171 = scalar_lea.vmem [#allocation5], %s170
        %p172 = scmp.lt.s32.totalorder %s19, 7
        %s173 = scalar_select %p172, %s19, 7
        %s174 = smul.addr %s173, 8
        %s175 = scalar_lea.vmem %s1, %s174
        %v176 = vld [vmem:[%s147] sm:$0xff]
        %v177 = vld [vmem:[%s175] sm:$0xff]
        %179 = vrot.lane.b32.xlu0 %v177, 32
        %v180 = vpop.permute.xlu0 %179
        %vm182 = vcmask 261120
        %v183 = vsel %vm182, %v177, %v180
        %v184 = vadd.f32 %v176, %v183
        %vm185 = vcmask 523264
        %186 = vst.msk [vmem:[%s171] sm:$0xff] %vm185, %v184
        %s187 = sand.u32 %s79, 1
        %s188 = scalar_lea.sflag [#allocation4], %s187
        %s189 = sand.u32 %s79, 1
        %s190 = smul.addr %s189, 8
        %s191 = scalar_lea.vmem [#allocation5], %s190
        // Predicated region
        $region33: #{tpu_custom_call.1} parent=27 // pred_check
          %p192 = pneg %p89
        $region34: #{tpu_custom_call.1} parent=27 // pred_check_branch
          %194 = sbr.rel (%p192) target = $region36
        $region35: #{tpu_custom_call.1} parent=27 // pred_region
          %s196 = ssub.s32 128, 128
          %197 = vsyncadd %s188, %s196
          %s198 = smul.addr %s19, 128
          %s199 = scalar_lea.hbm %s2, %s198
          %s201 = sshll.u32 %s191, 4
          %s202 = int_to_ptr.vmem [resolvable:$true] %s201
          %204 = dma.vmem_to_hbm [thread:$0]  %s202, 128, %s199, %s188
        $region36: #{tpu_custom_call.1} parent=27 // pred_fallthru
          _
      $region28: #{tpu_custom_call.1} parent=5 // pred_fallthru
        _
      %p205 = scmp.le.s32.totalorder 2, %s14
      // Predicated region
      $region37: #{tpu_custom_call.1} parent=5 // pred_check
        %p206 = pneg %p205
      $region38: #{tpu_custom_call.1} parent=5 // pred_check_branch
        %208 = sbr.rel (%p206) target = $region40
      $region39: #{tpu_custom_call.1} parent=5 // pred_region
        %s209 = ssub.s32 %s14, 2
        // Predicated region
        $region41: #{tpu_custom_call.1} parent=39 // pred_check
          %p210 = pneg %p95
        $region42: #{tpu_custom_call.1} parent=39 // pred_check_branch
          %212 = sbr.rel (%p210) target = $region44
        $region43: #{tpu_custom_call.1} parent=39 // pred_region
          %s213 = sand.u32 %s80, 1
          %s214 = scalar_lea.sflag [#allocation4], %s213
          %s215 = sand.u32 %s80, 1
          %s216 = smul.addr %s215, 8
          %s217 = scalar_lea.vmem [#allocation5], %s216
          %218 = dma.done %s214, 128
        $region44: #{tpu_custom_call.1} parent=39 // pred_fallthru
          _
      $region40: #{tpu_custom_call.1} parent=5 // pred_fallthru
        _
    $region6: #{tpu_custom_call.1} parent=1 // loop_footer
      %s18 = sadd.s32 1, %s14
    $region7: #{tpu_custom_call.1} parent=1 // loop_footer_branch
      %13 = sbr.rel target = $region3
    $region8: #{tpu_custom_call.1} parent=1 // loop_exit
      _
    %219 = vsyncpa [#allocation3], 1
    %s220 = scalar_lea.sflag [#allocation3], 1
    %221 = vsyncpa %s220, 1
    %222 = vsyncpa [#allocation4], 1
    %s223 = scalar_lea.sflag [#allocation4], 1
    %224 = vsyncpa %s223, 1

</llo_original>
